<compile_context>
chip_gen: v5e
topology: v5e:2x2
jax: 0.10.0
libtpu: 0.0.40
codegen_flags: <defaults>
</compile_context>

<pallas_src>
import functools

import jax
import jax.numpy as jnp
from jax import lax
from jax.experimental import pallas as pl
from jax.experimental.pallas import tpu as pltpu


def _round_up(x: int, m: int) -> int:
    return ((x + m - 1) // m) * m


@functools.lru_cache(maxsize=1)
def _vmem_limit_bytes() -> int:
    """~3/4 of physical VMEM, capped at 100 MiB (96 MiB v5e/v6e, 48 MiB v7x)."""
    try:
        cap = getattr(pltpu.get_tpu_info(), "vmem_capacity_bytes", None)
    except Exception:
        cap = None
    if not cap:
        cap = 64 * 1024 * 1024          # conservative fallback: smallest (v7x) VMEM
    return int(min(cap * 3 // 4, 100 * 1024 * 1024))


def _make_kernel(t_tile: int, d: int, matmul_dtype):
    """Kernel body with static time-tile size, dilation and MXU operand dtype."""

    def kernel(xp_ref, wd0_ref, wd1_ref, wd2_ref, bd_ref, wi_ref, bi_ref, o_ref):
        # xp_ref : (1, Tpad, C) f32   zero-padded full sequence of batch b (resident)
        # wd*_ref: (C, C)       mmdt  dilated-conv tap-k weight, (C_in, C_out)
        # bd_ref : (1, C)       f32   dilated-conv bias
        # wi_ref : (C, C)       mmdt  1x1-conv weight, (C_in, C_out)
        # bi_ref : (1, C)       f32   1x1-conv bias
        # o_ref  : (1, t_tile, C) f32
        t = pl.program_id(1)
        start = pl.multiple_of(t * t_tile, 8)       # tile start in padded coords

        # Taps loaded directly from the resident ref (the load unit absorbs the
        # d / 2d unaligned starts) -- no window temp, no f32 concatenate.
        x_l = xp_ref[0, pl.ds(start, t_tile), :]             # x[o - d]
        x_c = xp_ref[0, pl.ds(start + d, t_tile), :]         # x[o]   (residual)
        x_r = xp_ref[0, pl.ds(start + 2 * d, t_tile), :]     # x[o + d]

        # Three accumulating K=C MXU matmuls, f32 accumulation.
        h = jnp.dot(x_l.astype(matmul_dtype), wd0_ref[...],
                    preferred_element_type=jnp.float32)
        h = h + jnp.dot(x_c.astype(matmul_dtype), wd1_ref[...],
                        preferred_element_type=jnp.float32)
        h = h + jnp.dot(x_r.astype(matmul_dtype), wd2_ref[...],
                        preferred_element_type=jnp.float32)
        h = jnp.maximum(h + bd_ref[...], 0.0)                 # bias + ReLU in f32

        # 1x1 conv == channel matmul.
        y = jnp.dot(h.astype(matmul_dtype), wi_ref[...],
                    preferred_element_type=jnp.float32)
        y = y + bi_ref[...]

        # Dropout (eval mode) == identity; residual uses the exact f32 input.
        o_ref[0] = (x_c + y).astype(o_ref.dtype)

    return kernel


@functools.partial(jax.jit,
                   static_argnames=("dilation", "time_tile", "matmul_dtype"))
def dilated_residual_layer_ntc(x_ntc, w_dil, b_dil, w_in, b_in, *, dilation,
                               time_tile=2048, matmul_dtype=jnp.bfloat16):
    """Channels-last core: x (N, T, C) -> (N, T, C).

    A TCN stack should call this repeatedly so the NCT<->NTC layout passes are
    paid once for the whole stack, not once per layer.
    """
    N, T, C = x_ntc.shape
    d = int(dilation)
    assert w_dil.shape == (C, C, 3) and w_in.shape == (C, C, 1), \
        "residual layer requires in_channel == out_channels"

    limit = _vmem_limit_bytes()

    # Time tile: large enough to amortize the ~0.35us/grid-step overhead, capped
    # so the working set (double-buffered resident input + double-buffered output
    # + double-buffered weights) fits in ~7/8 of the vmem limit.
    row_bytes = C * 4                                         # one f32 time-row
    itemsize = jnp.dtype(matmul_dtype).itemsize
    w_bytes = 2 * (4 * C * C * itemsize + 2 * C * 4)          # weights+biases, x2 bufs
    budget = limit * 7 // 8 - w_bytes
    tT = min(_round_up(int(time_tile), 8), _round_up(T, 8))
    tT_cap = (budget - 2 * (T + 2 * d) * row_bytes) // (4 * row_bytes)
    if tT_cap >= 8:
        tT = max(8, min(tT, (tT_cap // 8) * 8))
    # TODO(synk): for sequences too long for full-VMEM residency even at tT=8,
    # fall back to memory_space=pl.ANY + manual halo DMA instead of failing.

    T_round = _round_up(T, tT)
    nT = T_round // tT
    Tpad = T_round + 2 * d

    # ONE fused zero-pad on time only (halo d each side + tile round-up); the
    # channel dim is NOT padded in HBM.
    x_pad = jnp.pad(x_ntc.astype(jnp.float32), ((0, 0), (d, d + T_round - T), (0, 0)))

    # PyTorch Conv1d weights -> matmul layout, already in the MXU operand dtype so
    # the weight DMA is half-width for bf16.
    wd = jnp.transpose(w_dil, (2, 1, 0)).astype(matmul_dtype)       # (3, C_in, C_out)
    wd0, wd1, wd2 = wd[0], wd[1], wd[2]
    wi = jnp.transpose(w_in[:, :, 0], (1, 0)).astype(matmul_dtype)  # (C_in, C_out)
    bd = b_dil.reshape(1, C).astype(jnp.float32)
    bi = b_in.reshape(1, C).astype(jnp.float32)

    kernel = _make_kernel(tT, d, matmul_dtype)

    # v7x: put the 2-TC split on the batch axis when N > 1 so each core only DMAs
    # the resident sequences of its own batch elements.
    dim_sem = ("parallel", "arbitrary") if N > 1 else ("parallel", "parallel")

    out = pl.pallas_call(
        kernel,
        out_shape=jax.ShapeDtypeStruct((N, T_round, C), jnp.float32),
        grid_spec=pltpu.PrefetchScalarGridSpec(
            num_scalar_prefetch=0,
            grid=(N, nT),
            in_specs=[
                # Full padded sequence of batch b; block index depends on b only,
                # so it is DMA'd once per batch element and stays resident across
                # the nT time tiles.
                pl.BlockSpec((1, Tpad, C), lambda b, t: (b, 0, 0)),
                pl.BlockSpec((C, C), lambda b, t: (0, 0)),   # dilated tap 0 (o-d)
                pl.BlockSpec((C, C), lambda b, t: (0, 0)),   # dilated tap 1 (o)
                pl.BlockSpec((C, C), lambda b, t: (0, 0)),   # dilated tap 2 (o+d)
                pl.BlockSpec((1, C), lambda b, t: (0, 0)),   # dilated-conv bias
                pl.BlockSpec((C, C), lambda b, t: (0, 0)),   # 1x1 conv weight
                pl.BlockSpec((1, C), lambda b, t: (0, 0)),   # 1x1 conv bias
            ],
            out_specs=pl.BlockSpec((1, tT, C), lambda b, t: (b, t, 0)),
        ),
        compiler_params=pltpu.CompilerParams(
            dimension_semantics=dim_sem,
            vmem_limit_bytes=limit),
    )(x_pad, wd0, wd1, wd2, bd, wi, bi)

    # Drop the tile round-up rows.
    return out[:, :T, :].astype(x_ntc.dtype)


@functools.partial(jax.jit,
                   static_argnames=("dilation", "time_tile", "matmul_dtype"))
def dilated_residual_layer(x_nct, w_dil, b_dil, w_in, b_in, *, dilation,
                           time_tile=2048, matmul_dtype=jnp.bfloat16):
    """PyTorch-layout forward: x (N, C, T) -> (N, C, T)."""
    out_ntc = dilated_residual_layer_ntc(
        jnp.transpose(x_nct, (0, 2, 1)), w_dil, b_dil, w_in, b_in,
        dilation=dilation, time_tile=time_tile, matmul_dtype=matmul_dtype)
    return jnp.transpose(out_ntc, (0, 2, 1)).astype(x_nct.dtype)


def reference_forward(x_nct, w_dil, b_dil, w_in, b_in, dilation):
    """Pure-JAX f32 reference matching the PyTorch forward (eval mode), NCT layout."""
    dn = lax.conv_dimension_numbers(x_nct.shape, w_dil.shape, ("NCH", "OIH", "NCH"))
    h = lax.conv_general_dilated(
        x_nct, w_dil, window_strides=(1,), padding=[(dilation, dilation)],
        rhs_dilation=(dilation,), dimension_numbers=dn)
    h = h + b_dil[None, :, None]
    h = jnp.maximum(h, 0.0)
    y = lax.conv_general_dilated(
        h, w_in, window_strides=(1,), padding=[(0, 0)], dimension_numbers=dn)
    y = y + b_in[None, :, None]
    return x_nct + y


if __name__ == "__main__":
    # Small shapes that still exercise: C < 128 (unpadded-channel path), multi-tile
    # time axis, and dilation halos that cross tile boundaries (d=2 and d=8).
    N, C, T = 2, 64, 40

    key = jax.random.PRNGKey(0)
    k1, k2, k3, k4, k5 = jax.random.split(key, 5)

    x_nct = jax.random.normal(k1, (N, C, T), dtype=jnp.float32)
    w_dil = jax.random.normal(k2, (C, C, 3), dtype=jnp.float32) * 0.1  # conv_dilated.weight
    b_dil = jax.random.normal(k3, (C,), dtype=jnp.float32) * 0.1       # conv_dilated.bias
    w_in = jax.random.normal(k4, (C, C, 1), dtype=jnp.float32) * 0.1   # conv_in.weight
    b_in = jax.random.normal(k5, (C,), dtype=jnp.float32) * 0.1        # conv_in.bias

    for dilation in (2, 8):
        ref = jax.block_until_ready(
            reference_forward(x_nct, w_dil, b_dil, w_in, b_in, dilation))

        # Exact-precision path (f32 MXU operands), small tile -> multi-tile halos.
        out_f32 = jax.block_until_ready(dilated_residual_layer(
            x_nct, w_dil, b_dil, w_in, b_in,
            dilation=dilation, time_tile=16, matmul_dtype=jnp.float32))
        assert out_f32.shape == (N, C, T)
        assert jnp.allclose(out_f32, ref, atol=1e-4, rtol=1e-4), \
            f"f32 path mismatch (dilation={dilation})"

        # Default perf path (bf16 MXU operands, f32 accumulation, default tile).
        out_bf16 = jax.block_until_ready(dilated_residual_layer(
            x_nct, w_dil, b_dil, w_in, b_in, dilation=dilation))
        assert out_bf16.shape == (N, C, T)
        assert jnp.allclose(out_bf16, ref, atol=5e-2, rtol=5e-2), \
            f"bf16 path mismatch (dilation={dilation})"

    print("KERNEL_OK")
</pallas_src>

<mosaic_0001>
module attributes {stable_mosaic.version = 11 : i64} {
  func.func @kernel(%arg0: i32, %arg1: i32, %arg2: memref<1x52x64xf32, #tpu.memory_space<vmem>>, %arg3: memref<64x64xf32, #tpu.memory_space<vmem>>, %arg4: memref<64x64xf32, #tpu.memory_space<vmem>>, %arg5: memref<64x64xf32, #tpu.memory_space<vmem>>, %arg6: memref<1x64xf32, #tpu.memory_space<vmem>>, %arg7: memref<64x64xf32, #tpu.memory_space<vmem>>, %arg8: memref<1x64xf32, #tpu.memory_space<vmem>>, %arg9: memref<1x16x64xf32, #tpu.memory_space<vmem>>) attributes {dimension_semantics = [#tpu.dimension_semantics<parallel>, #tpu.dimension_semantics<arbitrary>], iteration_bounds = array<i64: 2, 3>, scalar_prefetch = 0 : i64, scratch_operands = 0 : i64, tpu.core_type = #tpu.core_type<tc>, window_params = [{transform_indices = @transform_0, window_bounds = array<i64: 1, 52, 64>}, {pipeline_mode = #tpu.pipeline_mode<synchronous>, transform_indices = @transform_1, window_bounds = array<i64: 64, 64>}, {pipeline_mode = #tpu.pipeline_mode<synchronous>, transform_indices = @transform_2, window_bounds = array<i64: 64, 64>}, {pipeline_mode = #tpu.pipeline_mode<synchronous>, transform_indices = @transform_3, window_bounds = array<i64: 64, 64>}, {pipeline_mode = #tpu.pipeline_mode<synchronous>, transform_indices = @transform_4, window_bounds = array<i64: 1, 64>}, {pipeline_mode = #tpu.pipeline_mode<synchronous>, transform_indices = @transform_5, window_bounds = array<i64: 64, 64>}, {pipeline_mode = #tpu.pipeline_mode<synchronous>, transform_indices = @transform_6, window_bounds = array<i64: 1, 64>}, {transform_indices = @transform_7, window_bounds = array<i64: 1, 16, 64>}]} {
    %c16_i32 = arith.constant 16 : i32
    %0 = arith.muli %arg1, %c16_i32 : i32
    %1 = tpu.assume_multiple %0, 8 : i32
    %c0 = arith.constant 0 : index
    %2 = arith.index_cast %1 : i32 to index
    %c0_0 = arith.constant 0 : index
    %3 = vector.load %arg2[%c0, %2, %c0_0] : memref<1x52x64xf32, #tpu.memory_space<vmem>>, vector<1x16x64xf32>
    %4 = vector.shape_cast %3 : vector<1x16x64xf32> to vector<16x64xf32>
    %c2_i32 = arith.constant 2 : i32
    %5 = arith.addi %1, %c2_i32 : i32
    %c0_1 = arith.constant 0 : index
    %6 = arith.index_cast %5 : i32 to index
    %c0_2 = arith.constant 0 : index
    %7 = vector.load %arg2[%c0_1, %6, %c0_2] : memref<1x52x64xf32, #tpu.memory_space<vmem>>, vector<1x16x64xf32>
    %8 = vector.shape_cast %7 : vector<1x16x64xf32> to vector<16x64xf32>
    %c4_i32 = arith.constant 4 : i32
    %9 = arith.addi %1, %c4_i32 : i32
    %c0_3 = arith.constant 0 : index
    %10 = arith.index_cast %9 : i32 to index
    %c0_4 = arith.constant 0 : index
    %11 = vector.load %arg2[%c0_3, %10, %c0_4] : memref<1x52x64xf32, #tpu.memory_space<vmem>>, vector<1x16x64xf32>
    %12 = vector.shape_cast %11 : vector<1x16x64xf32> to vector<16x64xf32>
    %c0_5 = arith.constant 0 : index
    %c0_6 = arith.constant 0 : index
    %13 = vector.load %arg3[%c0_5, %c0_6] : memref<64x64xf32, #tpu.memory_space<vmem>>, vector<64x64xf32>
    %cst = arith.constant dense<0.000000e+00> : vector<16x64xf32>
    %14 = tpu.matmul %4, %13, %cst {dimension_numbers = #tpu.dot_dimension_numbers<[1], [0], [0], [1], [0, 0, 1, 1], [], []>} : vector<16x64xf32>, vector<64x64xf32>, vector<16x64xf32> -> vector<16x64xf32>
    %c0_7 = arith.constant 0 : index
    %c0_8 = arith.constant 0 : index
    %15 = vector.load %arg4[%c0_7, %c0_8] : memref<64x64xf32, #tpu.memory_space<vmem>>, vector<64x64xf32>
    %cst_9 = arith.constant dense<0.000000e+00> : vector<16x64xf32>
    %16 = tpu.matmul %8, %15, %cst_9 {dimension_numbers = #tpu.dot_dimension_numbers<[1], [0], [0], [1], [0, 0, 1, 1], [], []>} : vector<16x64xf32>, vector<64x64xf32>, vector<16x64xf32> -> vector<16x64xf32>
    %17 = arith.addf %14, %16 : vector<16x64xf32>
    %c0_10 = arith.constant 0 : index
    %c0_11 = arith.constant 0 : index
    %18 = vector.load %arg5[%c0_10, %c0_11] : memref<64x64xf32, #tpu.memory_space<vmem>>, vector<64x64xf32>
    %cst_12 = arith.constant dense<0.000000e+00> : vector<16x64xf32>
    %19 = tpu.matmul %12, %18, %cst_12 {dimension_numbers = #tpu.dot_dimension_numbers<[1], [0], [0], [1], [0, 0, 1, 1], [], []>} : vector<16x64xf32>, vector<64x64xf32>, vector<16x64xf32> -> vector<16x64xf32>
    %20 = arith.addf %17, %19 : vector<16x64xf32>
    %c0_13 = arith.constant 0 : index
    %c0_14 = arith.constant 0 : index
    %21 = vector.load %arg6[%c0_13, %c0_14] : memref<1x64xf32, #tpu.memory_space<vmem>>, vector<1x64xf32>
    %22 = vector.broadcast %21 : vector<1x64xf32> to vector<16x64xf32>
    %23 = arith.addf %20, %22 : vector<16x64xf32>
    %cst_15 = arith.constant 0.000000e+00 : f32
    %24 = vector.broadcast %cst_15 : f32 to vector<16x64xf32>
    %25 = arith.maximumf %23, %24 : vector<16x64xf32>
    %c0_16 = arith.constant 0 : index
    %c0_17 = arith.constant 0 : index
    %26 = vector.load %arg7[%c0_16, %c0_17] : memref<64x64xf32, #tpu.memory_space<vmem>>, vector<64x64xf32>
    %cst_18 = arith.constant dense<0.000000e+00> : vector<16x64xf32>
    %27 = tpu.matmul %25, %26, %cst_18 {dimension_numbers = #tpu.dot_dimension_numbers<[1], [0], [0], [1], [0, 0, 1, 1], [], []>} : vector<16x64xf32>, vector<64x64xf32>, vector<16x64xf32> -> vector<16x64xf32>
    %c0_19 = arith.constant 0 : index
    %c0_20 = arith.constant 0 : index
    %28 = vector.load %arg8[%c0_19, %c0_20] : memref<1x64xf32, #tpu.memory_space<vmem>>, vector<1x64xf32>
    %29 = vector.broadcast %28 : vector<1x64xf32> to vector<16x64xf32>
    %30 = arith.addf %27, %29 : vector<16x64xf32>
    %31 = arith.addf %8, %30 : vector<16x64xf32>
    %c0_21 = arith.constant 0 : index
    %c0_22 = arith.constant 0 : index
    %c0_23 = arith.constant 0 : index
    %32 = vector.load %arg9[%c0_21, %c0_22, %c0_23] : memref<1x16x64xf32, #tpu.memory_space<vmem>>, vector<1x16x64xf32>
    %33 = vector.shape_cast %32 : vector<1x16x64xf32> to vector<16x64xf32>
    %34 = vector.shape_cast %31 : vector<16x64xf32> to vector<1x16x64xf32>
    tpu.vector_store %arg9[%c0_21, %c0_22, %c0_23], %34 {strides = array<i32>} : memref<1x16x64xf32, #tpu.memory_space<vmem>>, vector<1x16x64xf32>,
    return
  }
  func.func @transform_0(%arg0: i32, %arg1: i32) -> (i32, i32, i32) {
    %c0_i32 = arith.constant 0 : i32
    %c0_i32_0 = arith.constant 0 : i32
    %c0_i32_1 = arith.constant 0 : i32
    return %arg0, %c0_i32, %c0_i32_0 : i32, i32, i32
  }
  func.func @transform_1(%arg0: i32, %arg1: i32) -> (i32, i32) {
    %c0_i32 = arith.constant 0 : i32
    %c0_i32_0 = arith.constant 0 : i32
    %c0_i32_1 = arith.constant 0 : i32
    return %c0_i32, %c0_i32_0 : i32, i32
  }
  func.func @transform_2(%arg0: i32, %arg1: i32) -> (i32, i32) {
    %c0_i32 = arith.constant 0 : i32
    %c0_i32_0 = arith.constant 0 : i32
    %c0_i32_1 = arith.constant 0 : i32
    return %c0_i32, %c0_i32_0 : i32, i32
  }
  func.func @transform_3(%arg0: i32, %arg1: i32) -> (i32, i32) {
    %c0_i32 = arith.constant 0 : i32
    %c0_i32_0 = arith.constant 0 : i32
    %c0_i32_1 = arith.constant 0 : i32
    return %c0_i32, %c0_i32_0 : i32, i32
  }
  func.func @transform_4(%arg0: i32, %arg1: i32) -> (i32, i32) {
    %c0_i32 = arith.constant 0 : i32
    %c0_i32_0 = arith.constant 0 : i32
    %c0_i32_1 = arith.constant 0 : i32
    return %c0_i32, %c0_i32_0 : i32, i32
  }
  func.func @transform_5(%arg0: i32, %arg1: i32) -> (i32, i32) {
    %c0_i32 = arith.constant 0 : i32
    %c0_i32_0 = arith.constant 0 : i32
    %c0_i32_1 = arith.constant 0 : i32
    return %c0_i32, %c0_i32_0 : i32, i32
  }
  func.func @transform_6(%arg0: i32, %arg1: i32) -> (i32, i32) {
    %c0_i32 = arith.constant 0 : i32
    %c0_i32_0 = arith.constant 0 : i32
    %c0_i32_1 = arith.constant 0 : i32
    return %c0_i32, %c0_i32_0 : i32, i32
  }
  func.func @transform_7(%arg0: i32, %arg1: i32) -> (i32, i32, i32) {
    %c0_i32 = arith.constant 0 : i32
    %c0_i32_0 = arith.constant 0 : i32
    return %arg0, %arg1, %c0_i32 : i32, i32, i32
  }
}

</mosaic_0001>

<llo_original>
// kernel: dilated_residual_layer_ntc.1
$region0: #{dilated_residual_layer_ntc.1}
  #allocation0 [shape = 'u32[]', space=smem, size = 0x4, offset = 0x4, fixed_abs, tag = 'smem constant byte address 0x4 - core index']
  #allocation1 [shape = 'u32[72,128]{1,0:T(1,128)}', space=vmem, size = 0x9000, scoped, tag = 'internal scratch']
  %s0 = inlined_call_operand.vmem [shape: f32[2,52,64], index: 0, kind: input, shape index: {}]
  %s1 = inlined_call_operand.vmem [shape: f32[64,64], index: 1, kind: input, shape index: {}]
  %s2 = inlined_call_operand.vmem [shape: f32[64,64], index: 2, kind: input, shape index: {}]
  %s3 = inlined_call_operand.vmem [shape: f32[64,64], index: 3, kind: input, shape index: {}]
  %s4 = inlined_call_operand.vmem [shape: f32[1,64], index: 4, kind: input, shape index: {}]
  %s5 = inlined_call_operand.vmem [shape: f32[64,64], index: 5, kind: input, shape index: {}]
  %s6 = inlined_call_operand.vmem [shape: f32[1,64], index: 6, kind: input, shape index: {}]
  %s7 = inlined_call_operand.vmem [shape: f32[2,48,64], index: 7, kind: output, shape index: {}]
  %s8 = sld [smem:[#allocation0]]
  $region61: #{dilated_residual_layer_ntc.1} parent=0
    _
  %s10 = ssub.s32 1, %s8
  %s11 = scalar_select 0, %s10, %s8
  loop: start=0, step=1, limit=8
  $region2: #{dilated_residual_layer_ntc.1} parent=0 // loop_pre_header
    _
  $region3: #{dilated_residual_layer_ntc.1} parent=0 // loop_header
    %s13 = sphi 0, %s17
    %p14 = scmp.ge.s32.totalorder %s13, 8
    %s20 = sphi 0, %s32
    %s21 = sphi 0, %s28
    %s22 = sphi 0, %s20
    %s23 = sphi 0, %s21
    %s24 = sphi 0, %s22
    %s25 = sphi 0, %s23
    %s35 = sphi 0, %s37
    %s38 = sphi 0, %s35
    %s39 = sphi 0, %s38
    %s55 = sphi 0, %s39
    %s59 = sphi 0, %s59
    %s61 = sphi 0, %s59
    %s62 = sphi 0, %s61
    %s76 = sphi 0, %s62
    %s80 = sphi 0, %s80
    %s82 = sphi 0, %s80
    %s83 = sphi 0, %s82
    %s97 = sphi 0, %s83
    %s101 = sphi 0, %s101
    %s103 = sphi 0, %s101
    %s104 = sphi 0, %s103
    %s118 = sphi 0, %s104
    %s122 = sphi 0, %s122
    %s124 = sphi 0, %s122
    %s125 = sphi 0, %s124
    %s139 = sphi 0, %s125
    %s143 = sphi 0, %s143
    %s145 = sphi 0, %s143
    %s146 = sphi 0, %s145
    %s160 = sphi 0, %s146
    %s164 = sphi 0, %s164
    %s166 = sphi 0, %s164
    %s167 = sphi 0, %s166
    %s181 = sphi 0, %s167
    %s189 = sphi 0, %s191
    %s192 = sphi 0, %s189
    %s193 = sphi 0, %s192
    %s209 = sphi 0, %s193
  $region4: #{dilated_residual_layer_ntc.1} parent=0 // loop_header_branch
    %16 = sbr.rel (%p14) target = $region8
  $region5: #{dilated_residual_layer_ntc.1} parent=0 // loop_body
    %s18 = ssub.s32 %s13, 1
    %s19 = ssub.s32 %s13, 2
    %s26 = sadd.s32 1, %s21
    %p27 = scmp.ge.s32.totalorder %s26, 3
    %s28 = scalar_select %p27, 0, %s26
    %s29 = sadd.s32 1, %s20
    %s30 = scalar_select %p27, %s29, %s20
    %p31 = scmp.ge.s32.totalorder %s30, 2
    %s32 = scalar_select %p31, 0, %s30
    %s33 = ssub.s32 %s20, %s32
    %p34 = scmp.eq.s32.totalorder %s33, 0
    %s36 = sadd.s32 %s35, 1
    %s37 = scalar_select %p34, %s35, %s36
    %p40 = pneg %p34
    %p41 = scmp.eq.s32.totalorder %s13, 5
    %p42 = por %p40, %p41
    %p43 = scmp.ne.s32.totalorder %s35, %s38
    %p44 = scmp.eq.s32.totalorder %s13, 0
    %p45 = por %p43, %p44
    %p46 = scmp.ne.s32.totalorder %s35, %s38
    %p47 = scmp.eq.s32.totalorder %s18, 5
    %p48 = por %p46, %p47
    %p49 = scmp.ne.s32.totalorder %s38, %s39
    %p50 = scmp.eq.s32.totalorder %s18, 0
    %p51 = por %p49, %p50
    %p52 = scmp.ne.s32.totalorder %s38, %s39
    %p53 = scmp.eq.s32.totalorder %s19, 5
    %p54 = por %p52, %p53
    %p56 = scmp.ne.s32.totalorder %s39, %s55
    %p57 = scmp.eq.s32.totalorder %s19, 0
    %p58 = por %p56, %p57
    %s60 = sadd.s32 %s59, 1
    %p63 = scmp.eq.s32.totalorder %s13, 5
    %p64 = scmp.ne.s32.totalorder %s59, %s61
    %p65 = scmp.eq.s32.totalorder %s13, 0
    %p66 = por %p64, %p65
    %p67 = scmp.ne.s32.totalorder %s59, %s61
    %p68 = scmp.eq.s32.totalorder %s18, 5
    %p69 = por %p67, %p68
    %p70 = scmp.ne.s32.totalorder %s61, %s62
    %p71 = scmp.eq.s32.totalorder %s18, 0
    %p72 = por %p70, %p71
    %p73 = scmp.ne.s32.totalorder %s61, %s62
    %p74 = scmp.eq.s32.totalorder %s19, 5
    %p75 = por %p73, %p74
    %p77 = scmp.ne.s32.totalorder %s62, %s76
    %p78 = scmp.eq.s32.totalorder %s19, 0
    %p79 = por %p77, %p78
    %s81 = sadd.s32 %s80, 1
    %p84 = scmp.eq.s32.totalorder %s13, 5
    %p85 = scmp.ne.s32.totalorder %s80, %s82
    %p86 = scmp.eq.s32.totalorder %s13, 0
    %p87 = por %p85, %p86
    %p88 = scmp.ne.s32.totalorder %s80, %s82
    %p89 = scmp.eq.s32.totalorder %s18, 5
    %p90 = por %p88, %p89
    %p91 = scmp.ne.s32.totalorder %s82, %s83
    %p92 = scmp.eq.s32.totalorder %s18, 0
    %p93 = por %p91, %p92
    %p94 = scmp.ne.s32.totalorder %s82, %s83
    %p95 = scmp.eq.s32.totalorder %s19, 5
    %p96 = por %p94, %p95
    %p98 = scmp.ne.s32.totalorder %s83, %s97
    %p99 = scmp.eq.s32.totalorder %s19, 0
    %p100 = por %p98, %p99
    %s102 = sadd.s32 %s101, 1
    %p105 = scmp.eq.s32.totalorder %s13, 5
    %p106 = scmp.ne.s32.totalorder %s101, %s103
    %p107 = scmp.eq.s32.totalorder %s13, 0
    %p108 = por %p106, %p107
    %p109 = scmp.ne.s32.totalorder %s101, %s103
    %p110 = scmp.eq.s32.totalorder %s18, 5
    %p111 = por %p109, %p110
    %p112 = scmp.ne.s32.totalorder %s103, %s104
    %p113 = scmp.eq.s32.totalorder %s18, 0
    %p114 = por %p112, %p113
    %p115 = scmp.ne.s32.totalorder %s103, %s104
    %p116 = scmp.eq.s32.totalorder %s19, 5
    %p117 = por %p115, %p116
    %p119 = scmp.ne.s32.totalorder %s104, %s118
    %p120 = scmp.eq.s32.totalorder %s19, 0
    %p121 = por %p119, %p120
    %s123 = sadd.s32 %s122, 1
    %p126 = scmp.eq.s32.totalorder %s13, 5
    %p127 = scmp.ne.s32.totalorder %s122, %s124
    %p128 = scmp.eq.s32.totalorder %s13, 0
    %p129 = por %p127, %p128
    %p130 = scmp.ne.s32.totalorder %s122, %s124
    %p131 = scmp.eq.s32.totalorder %s18, 5
    %p132 = por %p130, %p131
    %p133 = scmp.ne.s32.totalorder %s124, %s125
    %p134 = scmp.eq.s32.totalorder %s18, 0
    %p135 = por %p133, %p134
    %p136 = scmp.ne.s32.totalorder %s124, %s125
    %p137 = scmp.eq.s32.totalorder %s19, 5
    %p138 = por %p136, %p137
    %p140 = scmp.ne.s32.totalorder %s125, %s139
    %p141 = scmp.eq.s32.totalorder %s19, 0
    %p142 = por %p140, %p141
    %s144 = sadd.s32 %s143, 1
    %p147 = scmp.eq.s32.totalorder %s13, 5
    %p148 = scmp.ne.s32.totalorder %s143, %s145
    %p149 = scmp.eq.s32.totalorder %s13, 0
    %p150 = por %p148, %p149
    %p151 = scmp.ne.s32.totalorder %s143, %s145
    %p152 = scmp.eq.s32.totalorder %s18, 5
    %p153 = por %p151, %p152
    %p154 = scmp.ne.s32.totalorder %s145, %s146
    %p155 = scmp.eq.s32.totalorder %s18, 0
    %p156 = por %p154, %p155
    %p157 = scmp.ne.s32.totalorder %s145, %s146
    %p158 = scmp.eq.s32.totalorder %s19, 5
    %p159 = por %p157, %p158
    %p161 = scmp.ne.s32.totalorder %s146, %s160
    %p162 = scmp.eq.s32.totalorder %s19, 0
    %p163 = por %p161, %p162
    %s165 = sadd.s32 %s164, 1
    %p168 = scmp.eq.s32.totalorder %s13, 5
    %p169 = scmp.ne.s32.totalorder %s164, %s166
    %p170 = scmp.eq.s32.totalorder %s13, 0
    %p171 = por %p169, %p170
    %p172 = scmp.ne.s32.totalorder %s164, %s166
    %p173 = scmp.eq.s32.totalorder %s18, 5
    %p174 = por %p172, %p173
    %p175 = scmp.ne.s32.totalorder %s166, %s167
    %p176 = scmp.eq.s32.totalorder %s18, 0
    %p177 = por %p175, %p176
    %p178 = scmp.ne.s32.totalorder %s166, %s167
    %p179 = scmp.eq.s32.totalorder %s19, 5
    %p180 = por %p178, %p179
    %p182 = scmp.ne.s32.totalorder %s167, %s181
    %p183 = scmp.eq.s32.totalorder %s19, 0
    %p184 = por %p182, %p183
    %s185 = ssub.s32 %s20, %s32
    %s186 = ssub.s32 %s21, %s28
    %s187 = sor.u32 %s185, %s186
    %p188 = scmp.eq.s32.totalorder %s187, 0
    %s190 = sadd.s32 %s189, 1
    %s191 = scalar_select %p188, %s189, %s190
    %p194 = pneg %p188
    %p195 = scmp.eq.s32.totalorder %s13, 5
    %p196 = por %p194, %p195
    %p197 = scmp.ne.s32.totalorder %s189, %s192
    %p198 = scmp.eq.s32.totalorder %s13, 0
    %p199 = por %p197, %p198
    %p200 = scmp.ne.s32.totalorder %s189, %s192
    %p201 = scmp.eq.s32.totalorder %s18, 5
    %p202 = por %p200, %p201
    %p203 = scmp.ne.s32.totalorder %s192, %s193
    %p204 = scmp.eq.s32.totalorder %s18, 0
    %p205 = por %p203, %p204
    %p206 = scmp.ne.s32.totalorder %s192, %s193
    %p207 = scmp.eq.s32.totalorder %s19, 5
    %p208 = por %p206, %p207
    %p210 = scmp.ne.s32.totalorder %s193, %s209
    %p211 = scmp.eq.s32.totalorder %s19, 0
    %p212 = por %p210, %p211
    %p213 = scmp.le.s32.totalorder 1, %s13
    %p214 = scmp.lt.s32.totalorder %s13, 7
    %p215 = pnand %p213, %p214
    %p216 = pneg %p215
    // Predicated region
    $region9: #{dilated_residual_layer_ntc.1} parent=5 // pred_check
      _
    $region10: #{dilated_residual_layer_ntc.1} parent=5 // pred_check_branch
      %218 = sbr.rel (%p215) target = $region12
    $region11: #{dilated_residual_layer_ntc.1} parent=5 // pred_region
      %s219 = ssub.s32 %s13, 1
      // Predicated region
      $region13: #{dilated_residual_layer_ntc.1} parent=11 // pred_check
        %p220 = pneg %p72
      $region14: #{dilated_residual_layer_ntc.1} parent=11 // pred_check_branch
        %222 = sbr.rel (%p220) target = $region16
      $region15: #{dilated_residual_layer_ntc.1} parent=11 // pred_region
        _
      $region16: #{dilated_residual_layer_ntc.1} parent=11 // pred_fallthru
        _
      // Predicated region
      $region17: #{dilated_residual_layer_ntc.1} parent=11 // pred_check
        %p223 = pneg %p93
      $region18: #{dilated_residual_layer_ntc.1} parent=11 // pred_check_branch
        %225 = sbr.rel (%p223) target = $region20
      $region19: #{dilated_residual_layer_ntc.1} parent=11 // pred_region
        _
      $region20: #{dilated_residual_layer_ntc.1} parent=11 // pred_fallthru
        _
      // Predicated region
      $region21: #{dilated_residual_layer_ntc.1} parent=11 // pred_check
        %p226 = pneg %p114
      $region22: #{dilated_residual_layer_ntc.1} parent=11 // pred_check_branch
        %228 = sbr.rel (%p226) target = $region24
      $region23: #{dilated_residual_layer_ntc.1} parent=11 // pred_region
        _
      $region24: #{dilated_residual_layer_ntc.1} parent=11 // pred_fallthru
        _
      // Predicated region
      $region25: #{dilated_residual_layer_ntc.1} parent=11 // pred_check
        %p229 = pneg %p135
      $region26: #{dilated_residual_layer_ntc.1} parent=11 // pred_check_branch
        %231 = sbr.rel (%p229) target = $region28
      $region27: #{dilated_residual_layer_ntc.1} parent=11 // pred_region
        _
      $region28: #{dilated_residual_layer_ntc.1} parent=11 // pred_fallthru
        _
      // Predicated region
      $region29: #{dilated_residual_layer_ntc.1} parent=11 // pred_check
        %p232 = pneg %p156
      $region30: #{dilated_residual_layer_ntc.1} parent=11 // pred_check_branch
        %234 = sbr.rel (%p232) target = $region32
      $region31: #{dilated_residual_layer_ntc.1} parent=11 // pred_region
        _
      $region32: #{dilated_residual_layer_ntc.1} parent=11 // pred_fallthru
        _
      // Predicated region
      $region33: #{dilated_residual_layer_ntc.1} parent=11 // pred_check
        %p235 = pneg %p177
      $region34: #{dilated_residual_layer_ntc.1} parent=11 // pred_check_branch
        %237 = sbr.rel (%p235) target = $region36
      $region35: #{dilated_residual_layer_ntc.1} parent=11 // pred_region
        _
      $region36: #{dilated_residual_layer_ntc.1} parent=11 // pred_fallthru
        _
    $region12: #{dilated_residual_layer_ntc.1} parent=5 // pred_fallthru
      _
    %p238 = scmp.lt.s32.totalorder %s13, 6
    // Predicated region
    $region37: #{dilated_residual_layer_ntc.1} parent=5 // pred_check
      %p239 = pneg %p238
    $region38: #{dilated_residual_layer_ntc.1} parent=5 // pred_check_branch
      %241 = sbr.rel (%p239) target = $region40
    $region39: #{dilated_residual_layer_ntc.1} parent=5 // pred_region
      // Predicated region
      $region41: #{dilated_residual_layer_ntc.1} parent=39 // pred_check
        %p242 = pneg %p45
      $region42: #{dilated_residual_layer_ntc.1} parent=39 // pred_check_branch
        %244 = sbr.rel (%p242) target = $region44
      $region43: #{dilated_residual_layer_ntc.1} parent=39 // pred_region
        %p245 = scmp.lt.s32.totalorder %s20, 1
        %s246 = scalar_select %p245, %s20, 1
        %s247 = smul.addr %s246, 7
        %s248 = smul.addr %s247, 8
        %s249 = scalar_lea.vmem %s0, %s248
      $region44: #{dilated_residual_layer_ntc.1} parent=39 // pred_fallthru
        _
    $region40: #{dilated_residual_layer_ntc.1} parent=5 // pred_fallthru
      _
    %p250 = scmp.le.s32.totalorder 1, %s13
    %p251 = scmp.lt.s32.totalorder %s13, 7
    %p252 = pnand %p250, %p251
    %p253 = pneg %p252
    // Predicated region
    $region45: #{dilated_residual_layer_ntc.1} parent=5 // pred_check
      _
    $region46: #{dilated_residual_layer_ntc.1} parent=5 // pred_check_branch
      %255 = sbr.rel (%p252) target = $region48
    $region47: #{dilated_residual_layer_ntc.1} parent=5 // pred_region
      %s256 = ssub.s32 %s13, 1
      %p257 = scmp.lt.s32.totalorder %s22, 1
      %s258 = scalar_select %p257, %s22, 1
      %s259 = smul.addr %s258, 7
      %s260 = smul.addr %s259, 8
      %s261 = scalar_lea.vmem %s0, %s260
      %p262 = pneg %p51
      %p263 = pneg %p48
      %p264 = pneg %p72
      %p265 = pneg %p69
      %p266 = pneg %p93
      %p267 = pneg %p90
      %p268 = pneg %p114
      %p269 = pneg %p111
      %p270 = pneg %p135
      %p271 = pneg %p132
      %p272 = pneg %p156
      %p273 = pneg %p153
      %p274 = pneg %p177
      %p275 = pneg %p174
      %p276 = pneg %p205
      %p277 = pneg %p202
      %s278 = smul.u32 2, %s23
      %p279 = scmp.lt.s32.totalorder %s22, 1
      %s280 = scalar_select %p279, %s22, 1
      %p281 = scmp.lt.s32.totalorder %s278, 5
      %s282 = scalar_select %p281, %s278, 5
      %s283 = smul.addr %s280, 6
      %s284 = sadd.s32 %s282, %s283
      %s285 = smul.addr %s284, 8
      %s286 = scalar_lea.vmem %s7, %s285
      %p287 = scmp.lt.s32.totalorder %s22, 1
      %s288 = scalar_select %p287, %s22, 1
      %s289 = smul.addr %s288, 7
      %s290 = smul.addr %s289, 8
      %s291 = scalar_lea.vmem %s0, %s290
      %s292 = smul.u32 2, %s23
      %p293 = scmp.lt.s32.totalorder %s22, 1
      %s294 = scalar_select %p293, %s22, 1
      %p295 = scmp.lt.s32.totalorder %s292, 5
      %s296 = scalar_select %p295, %s292, 5
      %s297 = smul.addr %s294, 6
      %s298 = sadd.s32 %s296, %s297
      %s299 = smul.addr %s298, 8
      %s300 = scalar_lea.vmem %s7, %s299
      %s301 = smul.u32 2, %s23
      %s302 = smul.u32 %s23, 16
      %s303 = scalar_lea.vmem %s291, %s302
      %v304 = vld [vmem:[%s303] sm:$0xff]
      %v305 = vld [vmem:[%s303 + $0x8] sm:$0xff]
      %s306 = sadd.s32 %s302, 2
      %s307 = scalar_lea.vmem %s291, %s306
      %v308 = vld [vmem:[%s307] sm:$0xff]
      %v309 = vld [vmem:[%s307 + $0x8] sm:$0xff]
      %s310 = sadd.s32 %s302, 4
      %s311 = scalar_lea.vmem %s291, %s310
      %v312 = vld [vmem:[%s311] sm:$0xff]
      %v313 = vld [vmem:[%s311 + $0x8] sm:$0xff]
      %v314 = vld [vmem:[%s1] sm:$0xff]
      %v315 = vld [vmem:[%s1 + $0x8] sm:$0xff]
      %v316 = vld [vmem:[%s1 + $0x10] sm:$0xff]
      %v317 = vld [vmem:[%s1 + $0x18] sm:$0xff]
      %v318 = vld [vmem:[%s1 + $0x20] sm:$0xff]
      %v319 = vld [vmem:[%s1 + $0x28] sm:$0xff]
      %v320 = vld [vmem:[%s1 + $0x30] sm:$0xff]
      %v321 = vld [vmem:[%s1 + $0x38] sm:$0xff]
      %v322 = vld [vmem:[%s2] sm:$0xff]
      %v323 = vld [vmem:[%s2 + $0x8] sm:$0xff]
      %v324 = vld [vmem:[%s2 + $0x10] sm:$0xff]
      %v325 = vld [vmem:[%s2 + $0x18] sm:$0xff]
      %v326 = vld [vmem:[%s2 + $0x20] sm:$0xff]
      %v327 = vld [vmem:[%s2 + $0x28] sm:$0xff]
      %v328 = vld [vmem:[%s2 + $0x30] sm:$0xff]
      %v329 = vld [vmem:[%s2 + $0x38] sm:$0xff]
      %vm330 = vcmask 523264
      %v332 = vsel %vm330, %v308, 0
      %v335 = vsel %vm330, %v309, 0
      %337 = vmatpush.msra.mxu0 0.0
      %338 = vmatpush.msra.mxu0 0.0
      %339 = vmatpush.msra.mxu0 0.0
      %340 = vmatpush.msra.mxu0 0.0
      %341 = vmatpush.msra.mxu0 0.0
      %342 = vmatpush.msra.mxu0 0.0
      %343 = vmatpush.msra.mxu0 0.0
      %344 = vmatpush.msra.mxu0 0.0
      %345 = vmatpush.msra.mxu0 %v329
      %346 = vmatpush.msra.mxu0 %v328
      %347 = vmatpush.msra.mxu0 %v327
      %348 = vmatpush.msra.mxu0 %v326
      %349 = vmatpush.msra.mxu0 %v325
      %350 = vmatpush.msra.mxu0 %v324
      %351 = vmatpush.msra.mxu0 %v323
      %352 = vmatpush.msra.mxu0 %v322
      %353 = vmatmul.f32.gmra.mxu0 %v332
      %v354 = vpop.f32.mrf.mxu0
      %v355 = vadd.f32 0.0, %v354
      %356 = vmatmul.f32.gmra.mxu0 %v335
      %v357 = vpop.f32.mrf.mxu0
      %v358 = vadd.f32 0.0, %v357
      %359 = vdwg.mxu0
      %v361 = vsel %vm330, %v304, 0
      %v364 = vsel %vm330, %v305, 0
      %366 = vmatpush.msra.mxu0 0.0
      %367 = vmatpush.msra.mxu0 0.0
      %368 = vmatpush.msra.mxu0 0.0
      %369 = vmatpush.msra.mxu0 0.0
      %370 = vmatpush.msra.mxu0 0.0
      %371 = vmatpush.msra.mxu0 0.0
      %372 = vmatpush.msra.mxu0 0.0
      %373 = vmatpush.msra.mxu0 0.0
      %374 = vmatpush.msra.mxu0 %v321
      %375 = vmatpush.msra.mxu0 %v320
      %376 = vmatpush.msra.mxu0 %v319
      %377 = vmatpush.msra.mxu0 %v318
      %378 = vmatpush.msra.mxu0 %v317
      %379 = vmatpush.msra.mxu0 %v316
      %380 = vmatpush.msra.mxu0 %v315
      %381 = vmatpush.msra.mxu0 %v314
      %382 = vmatmul.f32.gmra.mxu0 %v361
      %v383 = vpop.f32.mrf.mxu0
      %v384 = vadd.f32 %v355, %v383
      %385 = vmatmul.f32.gmra.mxu0 %v364
      %v386 = vpop.f32.mrf.mxu0
      %v387 = vadd.f32 %v358, %v386
      %388 = vdwg.mxu0
      %v389 = vld [vmem:[%s3] sm:$0xff]
      %v390 = vld [vmem:[%s3 + $0x8] sm:$0xff]
      %v391 = vld [vmem:[%s3 + $0x10] sm:$0xff]
      %v392 = vld [vmem:[%s3 + $0x18] sm:$0xff]
      %v393 = vld [vmem:[%s3 + $0x20] sm:$0xff]
      %v394 = vld [vmem:[%s3 + $0x28] sm:$0xff]
      %v395 = vld [vmem:[%s3 + $0x30] sm:$0xff]
      %v396 = vld [vmem:[%s3 + $0x38] sm:$0xff]
      %v398 = vsel %vm330, %v312, 0
      %v401 = vsel %vm330, %v313, 0
      %403 = vmatpush.msra.mxu0 0.0
      %404 = vmatpush.msra.mxu0 0.0
      %405 = vmatpush.msra.mxu0 0.0
      %406 = vmatpush.msra.mxu0 0.0
      %407 = vmatpush.msra.mxu0 0.0
      %408 = vmatpush.msra.mxu0 0.0
      %409 = vmatpush.msra.mxu0 0.0
      %410 = vmatpush.msra.mxu0 0.0
      %411 = vmatpush.msra.mxu0 %v396
      %412 = vmatpush.msra.mxu0 %v395
      %413 = vmatpush.msra.mxu0 %v394
      %414 = vmatpush.msra.mxu0 %v393
      %415 = vmatpush.msra.mxu0 %v392
      %416 = vmatpush.msra.mxu0 %v391
      %417 = vmatpush.msra.mxu0 %v390
      %418 = vmatpush.msra.mxu0 %v389
      %419 = vmatmul.f32.gmra.mxu0 %v398
      %v420 = vpop.f32.mrf.mxu0
      %v421 = vadd.f32 0.0, %v420
      %422 = vmatmul.f32.gmra.mxu0 %v401
      %v423 = vpop.f32.mrf.mxu0
      %v424 = vadd.f32 0.0, %v423
      %425 = vdwg.mxu0
      %v426 = vadd.f32 %v384, %v421
      %v427 = vadd.f32 %v387, %v424
      %v428 = vld [vmem:[%s4] sm:$0x1]
      %v430 = vperm.slane %v428, 0
      %v432 = vadd.f32 %v426, %v430
      %v433 = vadd.f32 %v427, %v430
      %v434 = vmax.f32 %v432, 0.0
      %v435 = vmax.f32 %v433, 0.0
      %v436 = vld [vmem:[%s5] sm:$0xff]
      %v437 = vld [vmem:[%s5 + $0x8] sm:$0xff]
      %v438 = vld [vmem:[%s5 + $0x10] sm:$0xff]
      %v439 = vld [vmem:[%s5 + $0x18] sm:$0xff]
      %v440 = vld [vmem:[%s5 + $0x20] sm:$0xff]
      %v441 = vld [vmem:[%s5 + $0x28] sm:$0xff]
      %v442 = vld [vmem:[%s5 + $0x30] sm:$0xff]
      %v443 = vld [vmem:[%s5 + $0x38] sm:$0xff]
      %v444 = vld [vmem:[%s6] sm:$0x1]
      %v446 = vperm.slane %v444, 0
      %v449 = vsel %vm330, %v434, 0
      %v452 = vsel %vm330, %v435, 0
      %454 = vmatpush.msra.mxu0 0.0
      %455 = vmatpush.msra.mxu0 0.0
      %456 = vmatpush.msra.mxu0 0.0
      %457 = vmatpush.msra.mxu0 0.0
      %458 = vmatpush.msra.mxu0 0.0
      %459 = vmatpush.msra.mxu0 0.0
      %460 = vmatpush.msra.mxu0 0.0
      %461 = vmatpush.msra.mxu0 0.0
      %462 = vmatpush.msra.mxu0 %v443
      %463 = vmatpush.msra.mxu0 %v442
      %464 = vmatpush.msra.mxu0 %v441
      %465 = vmatpush.msra.mxu0 %v440
      %466 = vmatpush.msra.mxu0 %v439
      %467 = vmatpush.msra.mxu0 %v438
      %468 = vmatpush.msra.mxu0 %v437
      %469 = vmatpush.msra.mxu0 %v436
      %470 = vmatmul.f32.gmra.mxu0 %v449
      %v471 = vpop.f32.mrf.mxu0
      %v472 = vadd.f32 %v446, %v471
      %473 = vmatmul.f32.gmra.mxu0 %v452
      %v474 = vpop.f32.mrf.mxu0
      %v475 = vadd.f32 %v446, %v474
      %476 = vdwg.mxu0
      %v477 = vadd.f32 %v308, %v472
      %v478 = vadd.f32 %v309, %v475
      %479 = vst.msk [vmem:[%s300] sm:$0xff] %vm330, %v477
      %480 = vst.msk [vmem:[%s300 + $0x8] sm:$0xff] %vm330, %v478
      %s481 = smul.u32 2, %s23
      %p482 = scmp.lt.s32.totalorder %s22, 1
      %s483 = scalar_select %p482, %s22, 1
      %p484 = scmp.lt.s32.totalorder %s481, 5
      %s485 = scalar_select %p484, %s481, 5
      %s486 = smul.addr %s483, 6
      %s487 = sadd.s32 %s485, %s486
      %s488 = smul.addr %s487, 8
      %s489 = scalar_lea.vmem %s7, %s488
      // Predicated region
      $region49: #{dilated_residual_layer_ntc.1} parent=47 // pred_check
        %p490 = pneg %p202
      $region50: #{dilated_residual_layer_ntc.1} parent=47 // pred_check_branch
        %492 = sbr.rel (%p490) target = $region52
      $region51: #{dilated_residual_layer_ntc.1} parent=47 // pred_region
        %s493 = smul.u32 2, %s23
      $region52: #{dilated_residual_layer_ntc.1} parent=47 // pred_fallthru
        _
    $region48: #{dilated_residual_layer_ntc.1} parent=5 // pred_fallthru
      _
    %p494 = scmp.le.s32.totalorder 2, %s13
    // Predicated region
    $region53: #{dilated_residual_layer_ntc.1} parent=5 // pred_check
      %p495 = pneg %p494
    $region54: #{dilated_residual_layer_ntc.1} parent=5 // pred_check_branch
      %497 = sbr.rel (%p495) target = $region56
    $region55: #{dilated_residual_layer_ntc.1} parent=5 // pred_region
      %s498 = ssub.s32 %s13, 2
      // Predicated region
      $region57: #{dilated_residual_layer_ntc.1} parent=55 // pred_check
        %p499 = pneg %p208
      $region58: #{dilated_residual_layer_ntc.1} parent=55 // pred_check_branch
        %501 = sbr.rel (%p499) target = $region60
      $region59: #{dilated_residual_layer_ntc.1} parent=55 // pred_region
        %s502 = smul.u32 2, %s25
        %p503 = scmp.lt.s32.totalorder %s24, 1
        %s504 = scalar_select %p503, %s24, 1
        %p505 = scmp.lt.s32.totalorder %s502, 5
        %s506 = scalar_select %p505, %s502, 5
        %s507 = smul.addr %s504, 6
        %s508 = sadd.s32 %s506, %s507
        %s509 = smul.addr %s508, 8
        %s510 = scalar_lea.vmem %s7, %s509
      $region60: #{dilated_residual_layer_ntc.1} parent=55 // pred_fallthru
        _
    $region56: #{dilated_residual_layer_ntc.1} parent=5 // pred_fallthru
      _
  $region6: #{dilated_residual_layer_ntc.1} parent=0 // loop_footer
    %s17 = sadd.s32 1, %s13
  $region7: #{dilated_residual_layer_ntc.1} parent=0 // loop_footer_branch
    %12 = sbr.rel target = $region3
  $region8: #{dilated_residual_layer_ntc.1} parent=0 // loop_exit
    _

</llo_original>
